<compile_context>
chip_gen: v7x
topology: tpu7x:2x2x1
jax: 0.10.0
libtpu: 0.0.40
codegen_flags: <defaults>
</compile_context>

<pallas_src>
import jax
import jax.numpy as jnp
from jax import lax
from jax.experimental import pallas as pl
from jax.experimental.pallas import tpu as pltpu

# ---- problem sizes (stand-in for the `ck` config of the original code) ----
N_STATE = 8          # ck.n_state
N_MDP = 4            # ck.n_mdp
N_ACTION = 4         # ck.n_action
PRE_H = 16           # PreBeliefNN d_hidden11 = d_hidden12
PRE_OUT = 32         # PreBeliefNN.out
LSTM_H = 10          # BeliefLSTM.hidden
POST_H = 10          # PostBeliefNN d_hidden
AO = N_ACTION + N_STATE          # 12
PACK_W = N_MDP + 2 * LSTM_H      # 24  (belief | cell | hidden)
OUT_LANES = 128                  # lane-dense padded output width
GATE_STRIDE = 32                 # lane stride of each LSTM gate in the 128-wide block
GATE_W = 128

# Row offsets inside the packed weight slab (all starts are multiples of 8).
R_W1 = 0      # (12, 32)  block-diag layer11 (+) layer12
R_W2 = 16     # (32, 32)  PreBeliefNN layer2
R_W3 = 48     # (32, 32)  PreBeliefNN layer3
R_WGX = 80    # (32, 128) LSTM gates, x-part   (gate g at cols 32g:32g+10)
R_WGH = 112   # (10, 128) LSTM gates, h-part
R_WQ1 = 128   # (10, 10)  PostBeliefNN layer1
R_WQ2 = 144   # (10, 4)   PostBeliefNN layer2
W_ROWS = 160
B_ROWS = 8    # bias slab rows: 0=layer1, 1=layer2, 2=layer3, 3=gates, 4=q1, 5=q2


def _dot(a, b):
    return jnp.dot(a, b, preferred_element_type=jnp.float32)


# ---------------------------------------------------------------------------
# Kernel: one grid step = one chunk of TC timesteps.
#   Phase 1 (batched, recurrence-independent): PreBeliefNN + LSTM gate x-part
#            for all TC*B rows of the chunk in one matmul chain.
#   Phase 2 (serial): unrolled fori_loop over the TC timesteps, carrying c/h.
# ---------------------------------------------------------------------------
def _belief_seq_kernel(act_ref, obs_ref, c0_ref, h0_ref, w_ref, b_ref,
                       out_ref, gx_sc, c_sc, h_sc):
    relu = lambda v: jnp.maximum(v, 0.0)
    bsz = c0_ref.shape[0]
    tcb = gx_sc.shape[0]
    tc = tcb // bsz

    @pl.when(pl.program_id(0) == 0)
    def _():
        c_sc[...] = c0_ref[...]
        h_sc[...] = h0_ref[...]

    # ---- Phase 1: batched PreBeliefNN + gate x-part (TC*B rows at once) ----
    act = act_ref[...]                                   # (TC*B, 4)
    obs = obs_ref[...]                                   # (TC*B, 8)
    # Block-diagonal layer1 via two dots into the shared 32-lane output.
    y12 = relu(_dot(act, w_ref[R_W1:R_W1 + N_ACTION, 0:PRE_OUT])
               + _dot(obs, w_ref[R_W1 + N_ACTION:R_W1 + AO, 0:PRE_OUT])
               + b_ref[0:1, 0:PRE_OUT])
    z = relu(_dot(y12, w_ref[R_W2:R_W2 + PRE_OUT, 0:PRE_OUT])
             + b_ref[1:2, 0:PRE_OUT]) + y12              # residual
    x = relu(_dot(z, w_ref[R_W3:R_W3 + PRE_OUT, 0:PRE_OUT]) + b_ref[2:3, 0:PRE_OUT])
    # All four gates' x-contribution (+ gate bias) for the whole chunk.
    gx_sc[...] = _dot(x, w_ref[R_WGX:R_WGX + PRE_OUT, :]) + b_ref[3:4, :]

    # ---- Loop-invariant plumbing hoisted out of the serial loop ----
    wgh = w_ref[R_WGH:R_WGH + LSTM_H, :]
    wq1 = w_ref[R_WQ1:R_WQ1 + LSTM_H, 0:POST_H]
    wq2 = w_ref[R_WQ2:R_WQ2 + POST_H, 0:N_MDP]
    bq1 = jnp.broadcast_to(b_ref[4:5, 0:POST_H], (bsz, POST_H))
    bq2 = jnp.broadcast_to(b_ref[5:6, 0:N_MDP], (bsz, N_MDP))
    lane_pad = jnp.zeros((bsz, OUT_LANES - PACK_W), jnp.float32)

    # ---- Phase 2: serial recurrence over the TC timesteps of this chunk ----
    def step(t, carry):
        c_prev, h_prev = carry
        r0 = pl.multiple_of(t * bsz, bsz)
        gates = gx_sc[pl.ds(r0, bsz), :] + _dot(h_prev, wgh)     # (B, 128)
        sig = jax.nn.sigmoid(gates[:, 0:3 * GATE_STRIDE])        # f | i | o lanes
        tnh = jnp.tanh(gates[:, 3 * GATE_STRIDE:])               # c-bar lanes
        f = sig[:, 0:LSTM_H]
        i = sig[:, GATE_STRIDE:GATE_STRIDE + LSTM_H]
        o = sig[:, 2 * GATE_STRIDE:2 * GATE_STRIDE + LSTM_H]
        cbar = tnh[:, 0:LSTM_H]
        c = f * c_prev + i * cbar
        h = o * jnp.tanh(c)

        # PostBeliefNN
        tq = relu(_dot(h, wq1) + bq1)
        logits = _dot(tq, wq2) + bq2
        m = jnp.max(logits, axis=-1, keepdims=True)
        e = jnp.exp(logits - m)
        belief = e * pl.reciprocal(jnp.sum(e, axis=-1, keepdims=True), approx=True)

        # Lane-dense packed store: belief | cell | hidden | zero pad -> 128 lanes.
        out_ref[pl.ds(r0, bsz), :] = jnp.concatenate(
            [belief, c, h, lane_pad], axis=-1)
        return (c, h)

    c_fin, h_fin = lax.fori_loop(0, tc, step, (c_sc[...], h_sc[...]), unroll=True)
    c_sc[...] = c_fin
    h_sc[...] = h_fin


# ---------------------------------------------------------------------------
# Wrappers
# ---------------------------------------------------------------------------
def belief_seq(w_slab, b_slab, action_seq, obs_seq, cell0, hidden0, *, tc=8):
    """Whole rollout in one pallas_call, chunked over time."""
    T, B = action_seq.shape[0], action_seq.shape[1]
    tc = max(1, min(tc, T))
    n_chunks = pl.cdiv(T, tc)
    t_pad = n_chunks * tc
    if t_pad != T:
        pw = ((0, t_pad - T), (0, 0), (0, 0))
        action_seq = jnp.pad(action_seq, pw)
        obs_seq = jnp.pad(obs_seq, pw)
    tcb = tc * B
    act = action_seq.reshape(n_chunks, tcb, N_ACTION)
    obs = obs_seq.reshape(n_chunks, tcb, N_STATE)

    out = pl.pallas_call(
        _belief_seq_kernel,
        out_shape=jax.ShapeDtypeStruct((n_chunks, tcb, OUT_LANES), jnp.float32),
        grid=(n_chunks,),
        in_specs=[
            pl.BlockSpec((None, tcb, N_ACTION), lambda c: (c, 0, 0)),
            pl.BlockSpec((None, tcb, N_STATE), lambda c: (c, 0, 0)),
            pl.BlockSpec((B, LSTM_H), lambda c: (0, 0)),     # fetched once
            pl.BlockSpec((B, LSTM_H), lambda c: (0, 0)),     # fetched once
            pl.BlockSpec((W_ROWS, 128), lambda c: (0, 0)),   # weights resident
            pl.BlockSpec((B_ROWS, 128), lambda c: (0, 0)),   # biases resident
        ],
        out_specs=pl.BlockSpec((None, tcb, OUT_LANES), lambda c: (c, 0, 0)),
        scratch_shapes=[
            pltpu.VMEM((tcb, GATE_W), jnp.float32),   # gates_x for the chunk
            pltpu.VMEM((B, LSTM_H), jnp.float32),     # carried cell
            pltpu.VMEM((B, LSTM_H), jnp.float32),     # carried hidden
        ],
        compiler_params=pltpu.CompilerParams(
            dimension_semantics=("arbitrary",),        # time is a recurrence
            vmem_limit_bytes=32 * 1024 * 1024,
        ),
    )(act, obs, cell0, hidden0, w_slab, b_slab)

    out = out.reshape(t_pad, B, OUT_LANES)
    beliefs = out[:T, :, 0:N_MDP]
    c_T = out[T - 1, :, N_MDP:N_MDP + LSTM_H]
    h_T = out[T - 1, :, N_MDP + LSTM_H:PACK_W]
    return beliefs, c_T, h_T


def belief_step(w_slab, b_slab, action, obs, cell, hidden):
    """Single fused step — routed through the sequence kernel (T=1)."""
    beliefs, c, h = belief_seq(w_slab, b_slab, action[None], obs[None],
                               cell, hidden, tc=1)
    return beliefs[0], c, h


# ---------------------------------------------------------------------------
# Host-side parameter init + slab packing
# ---------------------------------------------------------------------------
def init_raw_params(key):
    def lin(k, din, dout, scale=0.1):
        kw, kb = jax.random.split(k)
        return (scale * jax.random.normal(kw, (din, dout), jnp.float32),
                scale * jax.random.normal(kb, (dout,), jnp.float32))

    ks = jax.random.split(key, 8)
    p = {}
    p["w11"], p["b11"] = lin(ks[0], N_ACTION, PRE_H)
    p["w12"], p["b12"] = lin(ks[1], N_STATE, PRE_H)
    p["w2"], p["b2"] = lin(ks[2], 2 * PRE_H, PRE_OUT)
    p["w3"], p["b3"] = lin(ks[3], PRE_OUT, PRE_OUT)
    for name, kk in zip("fioc", jax.random.split(ks[4], 4)):
        p[f"w{name}"], p[f"b{name}"] = lin(kk, PRE_OUT + LSTM_H, LSTM_H)
    p["wq1"], p["bq1"] = lin(ks[5], LSTM_H, POST_H)
    p["wq2"], p["bq2"] = lin(ks[6], POST_H, N_MDP)
    return p


def pack_params(p):
    W = jnp.zeros((W_ROWS, 128), jnp.float32)
    Bs = jnp.zeros((B_ROWS, 128), jnp.float32)
    # layer1 block-diagonal
    W = W.at[R_W1:R_W1 + N_ACTION, 0:PRE_H].set(p["w11"])
    W = W.at[R_W1 + N_ACTION:R_W1 + AO, PRE_H:2 * PRE_H].set(p["w12"])
    Bs = Bs.at[0, 0:PRE_H].set(p["b11"])
    Bs = Bs.at[0, PRE_H:2 * PRE_H].set(p["b12"])
    # layer2 / layer3
    W = W.at[R_W2:R_W2 + 2 * PRE_H, 0:PRE_OUT].set(p["w2"])
    Bs = Bs.at[1, 0:PRE_OUT].set(p["b2"])
    W = W.at[R_W3:R_W3 + PRE_OUT, 0:PRE_OUT].set(p["w3"])
    Bs = Bs.at[2, 0:PRE_OUT].set(p["b3"])
    # LSTM gates: gate g occupies lanes [32g, 32g+10)
    for g, name in enumerate("fioc"):
        col = GATE_STRIDE * g
        wg = p[f"w{name}"]                                  # (42, 10)
        W = W.at[R_WGX:R_WGX + PRE_OUT, col:col + LSTM_H].set(wg[:PRE_OUT])
        W = W.at[R_WGH:R_WGH + LSTM_H, col:col + LSTM_H].set(wg[PRE_OUT:])
        Bs = Bs.at[3, col:col + LSTM_H].set(p[f"b{name}"])
    # PostBeliefNN
    W = W.at[R_WQ1:R_WQ1 + LSTM_H, 0:POST_H].set(p["wq1"])
    Bs = Bs.at[4, 0:POST_H].set(p["bq1"])
    W = W.at[R_WQ2:R_WQ2 + POST_H, 0:N_MDP].set(p["wq2"])
    Bs = Bs.at[5, 0:N_MDP].set(p["bq2"])
    return W, Bs


# ---------------------------------------------------------------------------
# Pure-JAX reference (mirrors the PyTorch forward, dropout = identity)
# ---------------------------------------------------------------------------
def belief_stack_ref(p, action, obs, cell, hidden):
    relu = lambda v: jnp.maximum(v, 0.0)
    y1 = relu(action @ p["w11"] + p["b11"])
    y2 = relu(obs @ p["w12"] + p["b12"])
    y12 = jnp.concatenate([y1, y2], axis=-1)
    z = relu(y12 @ p["w2"] + p["b2"]) + y12
    x = relu(z @ p["w3"] + p["b3"])
    xh = jnp.concatenate([x, hidden], axis=-1)
    f = jax.nn.sigmoid(xh @ p["wf"] + p["bf"])
    i = jax.nn.sigmoid(xh @ p["wi"] + p["bi"])
    o = jax.nn.sigmoid(xh @ p["wo"] + p["bo"])
    cbar = jnp.tanh(xh @ p["wc"] + p["bc"])
    c = f * cell + i * cbar
    h = o * jnp.tanh(c)
    t = relu(h @ p["wq1"] + p["bq1"])
    belief = jax.nn.softmax(t @ p["wq2"] + p["bq2"], axis=-1)
    return belief, c, h


if __name__ == "__main__":
    root = jax.random.PRNGKey(0)
    kp, kin = jax.random.split(root)
    raw = init_raw_params(kp)
    w_slab, b_slab = pack_params(raw)

    B, T, TC = 8, 10, 8      # T not a multiple of TC -> exercises padding path
    ka, ko, ksa, kso = jax.random.split(kin, 4)
    action = jax.nn.softmax(jax.random.normal(ka, (B, N_ACTION), jnp.float32), axis=-1)
    obs = jax.nn.one_hot(jax.random.randint(ko, (B,), 0, N_STATE), N_STATE,
                         dtype=jnp.float32)
    cell = jnp.zeros((B, LSTM_H), jnp.float32)
    hidden = jnp.zeros((B, LSTM_H), jnp.float32)

    # --- single fused step ---
    belief, new_c, new_h = jax.block_until_ready(
        belief_step(w_slab, b_slab, action, obs, cell, hidden))
    rb, rc, rh = belief_stack_ref(raw, action, obs, cell, hidden)
    assert belief.shape == (B, N_MDP)
    assert new_c.shape == (B, LSTM_H) and new_h.shape == (B, LSTM_H)
    assert jnp.allclose(belief, rb, atol=2e-2, rtol=2e-2)
    assert jnp.allclose(new_c, rc, atol=2e-2, rtol=2e-2)
    assert jnp.allclose(new_h, rh, atol=2e-2, rtol=2e-2)

    # --- full rollout, time-chunked inside one pallas_call ---
    action_seq = jax.nn.softmax(
        jax.random.normal(ksa, (T, B, N_ACTION), jnp.float32), axis=-1)
    obs_seq = jax.nn.one_hot(jax.random.randint(kso, (T, B), 0, N_STATE),
                             N_STATE, dtype=jnp.float32)
    beliefs, c_T, h_T = jax.block_until_ready(
        belief_seq(w_slab, b_slab, action_seq, obs_seq, cell, hidden, tc=TC))
    assert beliefs.shape == (T, B, N_MDP)

    rc_t, rh_t, ref_beliefs = cell, hidden, []
    for t in range(T):
        rb_t, rc_t, rh_t = belief_stack_ref(raw, action_seq[t], obs_seq[t], rc_t, rh_t)
        ref_beliefs.append(rb_t)
    ref_beliefs = jnp.stack(ref_beliefs)
    assert jnp.allclose(beliefs, ref_beliefs, atol=2e-2, rtol=2e-2)
    assert jnp.allclose(c_T, rc_t, atol=2e-2, rtol=2e-2)
    assert jnp.allclose(h_T, rh_t, atol=2e-2, rtol=2e-2)

    print("KERNEL_OK")
</pallas_src>

<mosaic_0001>
module attributes {stable_mosaic.version = 11 : i64} {
  func.func @_belief_seq_kernel(%arg0: i32, %arg1: memref<1x8x4xf32, #tpu.memory_space<vmem>>, %arg2: memref<1x8x8xf32, #tpu.memory_space<vmem>>, %arg3: memref<8x10xf32, #tpu.memory_space<vmem>>, %arg4: memref<8x10xf32, #tpu.memory_space<vmem>>, %arg5: memref<160x128xf32, #tpu.memory_space<vmem>>, %arg6: memref<8x128xf32, #tpu.memory_space<vmem>>, %arg7: memref<1x8x128xf32, #tpu.memory_space<vmem>>, %arg8: memref<8x128xf32, #tpu.memory_space<vmem>>, %arg9: memref<8x10xf32, #tpu.memory_space<vmem>>, %arg10: memref<8x10xf32, #tpu.memory_space<vmem>>) attributes {dimension_semantics = [#tpu.dimension_semantics<arbitrary>], iteration_bounds = array<i64: 1>, scalar_prefetch = 0 : i64, scratch_operands = 3 : i64, tpu.core_type = #tpu.core_type<tc>, window_params = [{transform_indices = @transform_0, window_bounds = array<i64: 1, 8, 4>}, {transform_indices = @transform_1, window_bounds = array<i64: 1, 8, 8>}, {pipeline_mode = #tpu.pipeline_mode<synchronous>, transform_indices = @transform_2, window_bounds = array<i64: 8, 10>}, {pipeline_mode = #tpu.pipeline_mode<synchronous>, transform_indices = @transform_3, window_bounds = array<i64: 8, 10>}, {pipeline_mode = #tpu.pipeline_mode<synchronous>, transform_indices = @transform_4, window_bounds = array<i64: 160, 128>}, {pipeline_mode = #tpu.pipeline_mode<synchronous>, transform_indices = @transform_5, window_bounds = array<i64: 8, 128>}, {transform_indices = @transform_6, window_bounds = array<i64: 1, 8, 128>}]} {
    %c0_i32 = arith.constant 0 : i32
    %0 = arith.cmpi eq, %arg0, %c0_i32 : i32
    %1 = arith.extui %0 : i1 to i32
    %c0_i32_0 = arith.constant 0 : i32
    %2 = arith.cmpi ne, %1, %c0_i32_0 : i32
    scf.if %2 {
      %c0_52 = arith.constant 0 : index
      %c0_53 = arith.constant 0 : index
      %96 = vector.load %arg3[%c0_52, %c0_53] : memref<8x10xf32, #tpu.memory_space<vmem>>, vector<8x10xf32>
      %c0_54 = arith.constant 0 : index
      %c0_55 = arith.constant 0 : index
      %97 = vector.load %arg9[%c0_54, %c0_55] : memref<8x10xf32, #tpu.memory_space<vmem>>, vector<8x10xf32>
      tpu.vector_store %arg9[%c0_54, %c0_55], %96 {strides = array<i32>} : memref<8x10xf32, #tpu.memory_space<vmem>>, vector<8x10xf32>,
      %c0_56 = arith.constant 0 : index
      %c0_57 = arith.constant 0 : index
      %98 = vector.load %arg4[%c0_56, %c0_57] : memref<8x10xf32, #tpu.memory_space<vmem>>, vector<8x10xf32>
      %c0_58 = arith.constant 0 : index
      %c0_59 = arith.constant 0 : index
      %99 = vector.load %arg10[%c0_58, %c0_59] : memref<8x10xf32, #tpu.memory_space<vmem>>, vector<8x10xf32>
      tpu.vector_store %arg10[%c0_58, %c0_59], %98 {strides = array<i32>} : memref<8x10xf32, #tpu.memory_space<vmem>>, vector<8x10xf32>,
    } else {
    }
    %c0 = arith.constant 0 : index
    %c0_1 = arith.constant 0 : index
    %c0_2 = arith.constant 0 : index
    %3 = vector.load %arg1[%c0, %c0_1, %c0_2] : memref<1x8x4xf32, #tpu.memory_space<vmem>>, vector<1x8x4xf32>
    %4 = vector.shape_cast %3 : vector<1x8x4xf32> to vector<8x4xf32>
    %c0_3 = arith.constant 0 : index
    %c0_4 = arith.constant 0 : index
    %c0_5 = arith.constant 0 : index
    %5 = vector.load %arg2[%c0_3, %c0_4, %c0_5] : memref<1x8x8xf32, #tpu.memory_space<vmem>>, vector<1x8x8xf32>
    %6 = vector.shape_cast %5 : vector<1x8x8xf32> to vector<8x8xf32>
    %c0_6 = arith.constant 0 : index
    %c0_7 = arith.constant 0 : index
    %7 = vector.load %arg5[%c0_6, %c0_7] : memref<160x128xf32, #tpu.memory_space<vmem>>, vector<4x32xf32>
    %cst = arith.constant dense<0.000000e+00> : vector<8x32xf32>
    %8 = tpu.matmul %4, %7, %cst {dimension_numbers = #tpu.dot_dimension_numbers<[1], [0], [0], [1], [0, 0, 1, 1], [], []>} : vector<8x4xf32>, vector<4x32xf32>, vector<8x32xf32> -> vector<8x32xf32>
    %c4 = arith.constant 4 : index
    %c0_8 = arith.constant 0 : index
    %9 = vector.load %arg5[%c4, %c0_8] : memref<160x128xf32, #tpu.memory_space<vmem>>, vector<8x32xf32>
    %cst_9 = arith.constant dense<0.000000e+00> : vector<8x32xf32>
    %10 = tpu.matmul %6, %9, %cst_9 {dimension_numbers = #tpu.dot_dimension_numbers<[1], [0], [0], [1], [0, 0, 1, 1], [], []>} : vector<8x8xf32>, vector<8x32xf32>, vector<8x32xf32> -> vector<8x32xf32>
    %11 = arith.addf %8, %10 : vector<8x32xf32>
    %c0_10 = arith.constant 0 : index
    %c0_11 = arith.constant 0 : index
    %12 = vector.load %arg6[%c0_10, %c0_11] : memref<8x128xf32, #tpu.memory_space<vmem>>, vector<1x32xf32>
    %13 = vector.broadcast %12 : vector<1x32xf32> to vector<8x32xf32>
    %14 = arith.addf %11, %13 : vector<8x32xf32>
    %cst_12 = arith.constant 0.000000e+00 : f32
    %15 = vector.broadcast %cst_12 : f32 to vector<8x32xf32>
    %16 = arith.maximumf %14, %15 : vector<8x32xf32>
    %c16 = arith.constant 16 : index
    %c0_13 = arith.constant 0 : index
    %17 = vector.load %arg5[%c16, %c0_13] : memref<160x128xf32, #tpu.memory_space<vmem>>, vector<32x32xf32>
    %cst_14 = arith.constant dense<0.000000e+00> : vector<8x32xf32>
    %18 = tpu.matmul %16, %17, %cst_14 {dimension_numbers = #tpu.dot_dimension_numbers<[1], [0], [0], [1], [0, 0, 1, 1], [], []>} : vector<8x32xf32>, vector<32x32xf32>, vector<8x32xf32> -> vector<8x32xf32>
    %c1 = arith.constant 1 : index
    %c0_15 = arith.constant 0 : index
    %19 = vector.load %arg6[%c1, %c0_15] : memref<8x128xf32, #tpu.memory_space<vmem>>, vector<1x32xf32>
    %20 = vector.broadcast %19 : vector<1x32xf32> to vector<8x32xf32>
    %21 = arith.addf %18, %20 : vector<8x32xf32>
    %cst_16 = arith.constant 0.000000e+00 : f32
    %22 = vector.broadcast %cst_16 : f32 to vector<8x32xf32>
    %23 = arith.maximumf %21, %22 : vector<8x32xf32>
    %24 = arith.addf %23, %16 : vector<8x32xf32>
    %c48 = arith.constant 48 : index
    %c0_17 = arith.constant 0 : index
    %25 = vector.load %arg5[%c48, %c0_17] : memref<160x128xf32, #tpu.memory_space<vmem>>, vector<32x32xf32>
    %cst_18 = arith.constant dense<0.000000e+00> : vector<8x32xf32>
    %26 = tpu.matmul %24, %25, %cst_18 {dimension_numbers = #tpu.dot_dimension_numbers<[1], [0], [0], [1], [0, 0, 1, 1], [], []>} : vector<8x32xf32>, vector<32x32xf32>, vector<8x32xf32> -> vector<8x32xf32>
    %c2 = arith.constant 2 : index
    %c0_19 = arith.constant 0 : index
    %27 = vector.load %arg6[%c2, %c0_19] : memref<8x128xf32, #tpu.memory_space<vmem>>, vector<1x32xf32>
    %28 = vector.broadcast %27 : vector<1x32xf32> to vector<8x32xf32>
    %29 = arith.addf %26, %28 : vector<8x32xf32>
    %cst_20 = arith.constant 0.000000e+00 : f32
    %30 = vector.broadcast %cst_20 : f32 to vector<8x32xf32>
    %31 = arith.maximumf %29, %30 : vector<8x32xf32>
    %c80 = arith.constant 80 : index
    %c0_21 = arith.constant 0 : index
    %32 = vector.load %arg5[%c80, %c0_21] : memref<160x128xf32, #tpu.memory_space<vmem>>, vector<32x128xf32>
    %cst_22 = arith.constant dense<0.000000e+00> : vector<8x128xf32>
    %33 = tpu.matmul %31, %32, %cst_22 {dimension_numbers = #tpu.dot_dimension_numbers<[1], [0], [0], [1], [0, 0, 1, 1], [], []>} : vector<8x32xf32>, vector<32x128xf32>, vector<8x128xf32> -> vector<8x128xf32>
    %c3 = arith.constant 3 : index
    %c0_23 = arith.constant 0 : index
    %34 = vector.load %arg6[%c3, %c0_23] : memref<8x128xf32, #tpu.memory_space<vmem>>, vector<1x128xf32>
    %35 = vector.broadcast %34 : vector<1x128xf32> to vector<8x128xf32>
    %36 = arith.addf %33, %35 : vector<8x128xf32>
    %c0_24 = arith.constant 0 : index
    %c0_25 = arith.constant 0 : index
    %37 = vector.load %arg8[%c0_24, %c0_25] : memref<8x128xf32, #tpu.memory_space<vmem>>, vector<8x128xf32>
    tpu.vector_store %arg8[%c0_24, %c0_25], %36 {strides = array<i32>} : memref<8x128xf32, #tpu.memory_space<vmem>>, vector<8x128xf32>,
    %c112 = arith.constant 112 : index
    %c0_26 = arith.constant 0 : index
    %38 = vector.load %arg5[%c112, %c0_26] : memref<160x128xf32, #tpu.memory_space<vmem>>, vector<10x128xf32>
    %c128 = arith.constant 128 : index
    %c0_27 = arith.constant 0 : index
    %39 = vector.load %arg5[%c128, %c0_27] : memref<160x128xf32, #tpu.memory_space<vmem>>, vector<10x10xf32>
    %c144 = arith.constant 144 : index
    %c0_28 = arith.constant 0 : index
    %40 = vector.load %arg5[%c144, %c0_28] : memref<160x128xf32, #tpu.memory_space<vmem>>, vector<10x4xf32>
    %c4_29 = arith.constant 4 : index
    %c0_30 = arith.constant 0 : index
    %41 = vector.load %arg6[%c4_29, %c0_30] : memref<8x128xf32, #tpu.memory_space<vmem>>, vector<1x10xf32>
    %42 = vector.shape_cast %41 : vector<1x10xf32> to vector<1x10xf32>
    %43 = vector.broadcast %42 : vector<1x10xf32> to vector<8x10xf32>
    %c5 = arith.constant 5 : index
    %c0_31 = arith.constant 0 : index
    %44 = vector.load %arg6[%c5, %c0_31] : memref<8x128xf32, #tpu.memory_space<vmem>>, vector<1x4xf32>
    %45 = vector.shape_cast %44 : vector<1x4xf32> to vector<1x4xf32>
    %46 = vector.broadcast %45 : vector<1x4xf32> to vector<8x4xf32>
    %cst_32 = arith.constant 0.000000e+00 : f32
    %47 = vector.broadcast %cst_32 : f32 to vector<8x104xf32>
    %c0_33 = arith.constant 0 : index
    %c0_34 = arith.constant 0 : index
    %48 = vector.load %arg9[%c0_33, %c0_34] : memref<8x10xf32, #tpu.memory_space<vmem>>, vector<8x10xf32>
    %c0_35 = arith.constant 0 : index
    %c0_36 = arith.constant 0 : index
    %49 = vector.load %arg10[%c0_35, %c0_36] : memref<8x10xf32, #tpu.memory_space<vmem>>, vector<8x10xf32>
    %c0_i32_37 = arith.constant 0 : i32
    %c8_i32 = arith.constant 8 : i32
    %50 = arith.muli %c0_i32_37, %c8_i32 : i32
    %51 = tpu.assume_multiple %50, 8 : i32
    %52 = arith.index_cast %51 : i32 to index
    %c0_38 = arith.constant 0 : index
    %53 = vector.load %arg8[%52, %c0_38] : memref<8x128xf32, #tpu.memory_space<vmem>>, vector<8x128xf32>
    %cst_39 = arith.constant dense<0.000000e+00> : vector<8x128xf32>
    %54 = tpu.matmul %49, %38, %cst_39 {dimension_numbers = #tpu.dot_dimension_numbers<[1], [0], [0], [1], [0, 0, 1, 1], [], []>} : vector<8x10xf32>, vector<10x128xf32>, vector<8x128xf32> -> vector<8x128xf32>
    %55 = arith.addf %53, %54 : vector<8x128xf32>
    %56 = vector.extract_strided_slice %55 {offsets = [0, 0], sizes = [8, 96], strides = [1, 1]} : vector<8x128xf32> to vector<8x96xf32>
    %57 = arith.negf %56 : vector<8x96xf32>
    %58 = math.exp %57 : vector<8x96xf32>
    %cst_40 = arith.constant 1.000000e+00 : f32
    %59 = vector.broadcast %cst_40 : f32 to vector<8x96xf32>
    %60 = arith.addf %59, %58 : vector<8x96xf32>
    %61 = arith.divf %59, %60 : vector<8x96xf32>
    %62 = vector.extract_strided_slice %55 {offsets = [0, 96], sizes = [8, 32], strides = [1, 1]} : vector<8x128xf32> to vector<8x32xf32>
    %63 = math.tanh %62 : vector<8x32xf32>
    %64 = vector.extract_strided_slice %61 {offsets = [0, 0], sizes = [8, 10], strides = [1, 1]} : vector<8x96xf32> to vector<8x10xf32>
    %65 = vector.extract_strided_slice %61 {offsets = [0, 32], sizes = [8, 10], strides = [1, 1]} : vector<8x96xf32> to vector<8x10xf32>
    %66 = vector.extract_strided_slice %61 {offsets = [0, 64], sizes = [8, 10], strides = [1, 1]} : vector<8x96xf32> to vector<8x10xf32>
    %67 = vector.extract_strided_slice %63 {offsets = [0, 0], sizes = [8, 10], strides = [1, 1]} : vector<8x32xf32> to vector<8x10xf32>
    %68 = arith.mulf %64, %48 : vector<8x10xf32>
    %69 = arith.mulf %65, %67 : vector<8x10xf32>
    %70 = arith.addf %68, %69 : vector<8x10xf32>
    %71 = math.tanh %70 : vector<8x10xf32>
    %72 = arith.mulf %66, %71 : vector<8x10xf32>
    %cst_41 = arith.constant dense<0.000000e+00> : vector<8x10xf32>
    %73 = tpu.matmul %72, %39, %cst_41 {dimension_numbers = #tpu.dot_dimension_numbers<[1], [0], [0], [1], [0, 0, 1, 1], [], []>} : vector<8x10xf32>, vector<10x10xf32>, vector<8x10xf32> -> vector<8x10xf32>
    %74 = arith.addf %73, %43 : vector<8x10xf32>
    %cst_42 = arith.constant 0.000000e+00 : f32
    %75 = vector.broadcast %cst_42 : f32 to vector<8x10xf32>
    %76 = arith.maximumf %74, %75 : vector<8x10xf32>
    %cst_43 = arith.constant dense<0.000000e+00> : vector<8x4xf32>
    %77 = tpu.matmul %76, %40, %cst_43 {dimension_numbers = #tpu.dot_dimension_numbers<[1], [0], [0], [1], [0, 0, 1, 1], [], []>} : vector<8x10xf32>, vector<10x4xf32>, vector<8x4xf32> -> vector<8x4xf32>
    %78 = arith.addf %77, %46 : vector<8x4xf32>
    %cst_44 = arith.constant dense<0xFF800000> : vector<8xf32>
    %79 = vector.multi_reduction <maximumf>, %78, %cst_44 [1] : vector<8x4xf32> to vector<8xf32>
    %80 = vector.shape_cast %79 : vector<8xf32> to vector<8x1xf32>
    %81 = vector.broadcast %80 : vector<8x1xf32> to vector<8x4xf32>
    %82 = arith.subf %78, %81 : vector<8x4xf32>
    %83 = math.exp %82 : vector<8x4xf32>
    %cst_45 = arith.constant dense<0.000000e+00> : vector<8xf32>
    %84 = vector.multi_reduction <add>, %83, %cst_45 [1] : vector<8x4xf32> to vector<8xf32>
    %85 = vector.shape_cast %84 : vector<8xf32> to vector<8x1xf32>
    %86 = tpu.reciprocal %85 {approx = true} : vector<8x1xf32> -> vector<8x1xf32>
    %87 = vector.broadcast %86 : vector<8x1xf32> to vector<8x4xf32>
    %88 = arith.mulf %83, %87 : vector<8x4xf32>
    %89 = tpu.concatenate %88, %70, %72, %47 in 1 : vector<8x4xf32>, vector<8x10xf32>, vector<8x10xf32>, vector<8x104xf32> -> vector<8x128xf32>
    %c0_46 = arith.constant 0 : index
    %90 = arith.index_cast %51 : i32 to index
    %c0_47 = arith.constant 0 : index
    %91 = vector.load %arg7[%c0_46, %90, %c0_47] : memref<1x8x128xf32, #tpu.memory_space<vmem>>, vector<1x8x128xf32>
    %92 = vector.shape_cast %91 : vector<1x8x128xf32> to vector<8x128xf32>
    %93 = vector.shape_cast %89 : vector<8x128xf32> to vector<1x8x128xf32>
    tpu.vector_store %arg7[%c0_46, %90, %c0_47], %93 {strides = array<i32>} : memref<1x8x128xf32, #tpu.memory_space<vmem>>, vector<1x8x128xf32>,
    %c1_i32 = arith.constant 1 : i32
    %c0_48 = arith.constant 0 : index
    %c0_49 = arith.constant 0 : index
    %94 = vector.load %arg9[%c0_48, %c0_49] : memref<8x10xf32, #tpu.memory_space<vmem>>, vector<8x10xf32>
    tpu.vector_store %arg9[%c0_48, %c0_49], %70 {strides = array<i32>} : memref<8x10xf32, #tpu.memory_space<vmem>>, vector<8x10xf32>,
    %c0_50 = arith.constant 0 : index
    %c0_51 = arith.constant 0 : index
    %95 = vector.load %arg10[%c0_50, %c0_51] : memref<8x10xf32, #tpu.memory_space<vmem>>, vector<8x10xf32>
    tpu.vector_store %arg10[%c0_50, %c0_51], %72 {strides = array<i32>} : memref<8x10xf32, #tpu.memory_space<vmem>>, vector<8x10xf32>,
    return
  }
  func.func @transform_0(%arg0: i32) -> (i32, i32, i32) {
    %c0_i32 = arith.constant 0 : i32
    %c0_i32_0 = arith.constant 0 : i32
    %c0_i32_1 = arith.constant 0 : i32
    return %arg0, %c0_i32, %c0_i32_0 : i32, i32, i32
  }
  func.func @transform_1(%arg0: i32) -> (i32, i32, i32) {
    %c0_i32 = arith.constant 0 : i32
    %c0_i32_0 = arith.constant 0 : i32
    %c0_i32_1 = arith.constant 0 : i32
    return %arg0, %c0_i32, %c0_i32_0 : i32, i32, i32
  }
  func.func @transform_2(%arg0: i32) -> (i32, i32) {
    %c0_i32 = arith.constant 0 : i32
    %c0_i32_0 = arith.constant 0 : i32
    %c0_i32_1 = arith.constant 0 : i32
    return %c0_i32, %c0_i32_0 : i32, i32
  }
  func.func @transform_3(%arg0: i32) -> (i32, i32) {
    %c0_i32 = arith.constant 0 : i32
    %c0_i32_0 = arith.constant 0 : i32
    %c0_i32_1 = arith.constant 0 : i32
    return %c0_i32, %c0_i32_0 : i32, i32
  }
  func.func @transform_4(%arg0: i32) -> (i32, i32) {
    %c0_i32 = arith.constant 0 : i32
    %c0_i32_0 = arith.constant 0 : i32
    %c0_i32_1 = arith.constant 0 : i32
    return %c0_i32, %c0_i32_0 : i32, i32
  }
  func.func @transform_5(%arg0: i32) -> (i32, i32) {
    %c0_i32 = arith.constant 0 : i32
    %c0_i32_0 = arith.constant 0 : i32
    %c0_i32_1 = arith.constant 0 : i32
    return %c0_i32, %c0_i32_0 : i32, i32
  }
  func.func @transform_6(%arg0: i32) -> (i32, i32, i32) {
    %c0_i32 = arith.constant 0 : i32
    %c0_i32_0 = arith.constant 0 : i32
    %c0_i32_1 = arith.constant 0 : i32
    return %arg0, %c0_i32, %c0_i32_0 : i32, i32, i32
  }
}

</mosaic_0001>

<llo_original>
// kernel: tpu_custom_call.1
$region0: #{tpu_custom_call.1}
  #allocation0 [shape = 'u32[]', space=smem, size = 0x4, offset = 0x4, fixed_abs, tag = 'smem constant byte address 0x4 - core index']
  #allocation1 [shape = 'u32[144,128]{1,0:T(1,128)}', space=vmem, size = 0x12000, scoped, tag = 'internal scratch']
  #allocation2 [shape = 'f32[8,128]{1,0:T(8,128)}', space=vmem, size = 0x1000, scoped, tag = 'scratch operand']
  #allocation3 [shape = 'f32[8,10]{1,0:T(8,128)}', space=vmem, size = 0x1000, scoped, tag = 'scratch operand']
  #allocation4 [shape = 'f32[8,10]{1,0:T(8,128)}', space=vmem, size = 0x1000, scoped, tag = 'scratch operand']
  %s0 = inlined_call_operand.vmem [shape: f32[1,8,4], index: 0, kind: input, shape index: {}]
  %s1 = inlined_call_operand.vmem [shape: f32[1,8,8], index: 1, kind: input, shape index: {}]
  %s2 = inlined_call_operand.vmem [shape: f32[8,10], index: 2, kind: input, shape index: {}]
  %s3 = inlined_call_operand.hbm [shape: f32[8,10], index: 3, kind: input, shape index: {}]
  %s4 = inlined_call_operand.hbm [shape: f32[160,128], index: 4, kind: input, shape index: {}]
  %s5 = inlined_call_operand.vmem [shape: f32[8,128], index: 5, kind: input, shape index: {}]
  %s6 = inlined_call_operand.hbm [shape: f32[1,8,128], index: 6, kind: output, shape index: {}]
  %s7 = sld [smem:[#allocation0]]
  $region46: #{tpu_custom_call.1} parent=0
    _
  %s9 = ssub.s32 1, %s7
  %s10 = scalar_select 0, %s9, %s7
  $region1: #{tpu_custom_call.1} parent=0
    #allocation5 [shape = 'u8[4096]{0}', space=vmem, size = 0x1000, scoped, tag = 'input window, operand 3, single buffered']
    #allocation6 [shape = 's32[1]{0}', space=sflag, size = 0x4, scoped, tag = 'scoped memory for tpu_custom_call.1']
    #allocation7 [shape = 's32[1]{0}', space=sflag, size = 0x4, scoped, tag = 'scoped memory for tpu_custom_call.1']
    #allocation8 [shape = 'u8[81920]{0}', space=vmem, size = 0x14000, scoped, tag = 'input window, operand 4, single buffered']
    #allocation9 [shape = 's32[1]{0}', space=sflag, size = 0x4, scoped, tag = 'scoped memory for tpu_custom_call.1']
    #allocation10 [shape = 'u8[4096]{0}', space=vmem, size = 0x1000, scoped, tag = 'output window, operand 0, single buffered']
    %11 = vsyncpa [#allocation6], 0
    %12 = vsyncpa [#allocation9], 0
    %13 = vsyncpa [#allocation7], 0
    // Predicated region
    $region2: #{tpu_custom_call.1} parent=1 // pred_check
      _
    $region3: #{tpu_custom_call.1} parent=1 // pred_check_branch
      %15 = sbr.rel (0) target = $region5
    $region4: #{tpu_custom_call.1} parent=1 // pred_region
      _
    $region5: #{tpu_custom_call.1} parent=1 // pred_fallthru
      _
    // Predicated region
    $region6: #{tpu_custom_call.1} parent=1 // pred_check
      _
    $region7: #{tpu_custom_call.1} parent=1 // pred_check_branch
      %17 = sbr.rel (0) target = $region9
    $region8: #{tpu_custom_call.1} parent=1 // pred_region
      _
    $region9: #{tpu_custom_call.1} parent=1 // pred_fallthru
      _
    // Predicated region
    $region10: #{tpu_custom_call.1} parent=1 // pred_check
      _
    $region11: #{tpu_custom_call.1} parent=1 // pred_check_branch
      %19 = sbr.rel (0) target = $region13
    $region12: #{tpu_custom_call.1} parent=1 // pred_region
      _
    $region13: #{tpu_custom_call.1} parent=1 // pred_fallthru
      _
    // Predicated region
    $region14: #{tpu_custom_call.1} parent=1 // pred_check
      _
    $region15: #{tpu_custom_call.1} parent=1 // pred_check_branch
      %21 = sbr.rel (0) target = $region17
    $region16: #{tpu_custom_call.1} parent=1 // pred_region
      %s23 = ssub.s32 128, 128
      %24 = vsyncadd [#allocation6], %s23
      %s26 = sshll.u32 [#allocation5], 4
      %s27 = int_to_ptr.vmem [resolvable:$true] %s26
      %29 = dma.hbm_to_vmem [thread:$0]  %s3, 128, %s27, [#allocation6]
    $region17: #{tpu_custom_call.1} parent=1 // pred_fallthru
      _
    // Predicated region
    $region18: #{tpu_custom_call.1} parent=1 // pred_check
      _
    $region19: #{tpu_custom_call.1} parent=1 // pred_check_branch
      %31 = sbr.rel (0) target = $region21
    $region20: #{tpu_custom_call.1} parent=1 // pred_region
      %s33 = ssub.s32 2560, 2560
      %34 = vsyncadd [#allocation9], %s33
      %s35 = sshll.u32 [#allocation8], 4
      %s36 = int_to_ptr.vmem [resolvable:$true] %s35
      %41 = dma.hbm_to_vmem [thread:$0]  %s4, 2560, %s36, [#allocation9], 128, 128, 8
    $region21: #{tpu_custom_call.1} parent=1 // pred_fallthru
      _
    // Predicated region
    $region22: #{tpu_custom_call.1} parent=1 // pred_check
      _
    $region23: #{tpu_custom_call.1} parent=1 // pred_check_branch
      %43 = sbr.rel (0) target = $region25
    $region24: #{tpu_custom_call.1} parent=1 // pred_region
      _
    $region25: #{tpu_custom_call.1} parent=1 // pred_fallthru
      _
    // Predicated region
    $region26: #{tpu_custom_call.1} parent=1 // pred_check
      _
    $region27: #{tpu_custom_call.1} parent=1 // pred_check_branch
      %45 = sbr.rel (0) target = $region29
    $region28: #{tpu_custom_call.1} parent=1 // pred_region
      %46 = dma.done [#allocation6], 128
    $region29: #{tpu_custom_call.1} parent=1 // pred_fallthru
      _
    // Predicated region
    $region30: #{tpu_custom_call.1} parent=1 // pred_check
      _
    $region31: #{tpu_custom_call.1} parent=1 // pred_check_branch
      %48 = sbr.rel (0) target = $region33
    $region32: #{tpu_custom_call.1} parent=1 // pred_region
      %49 = dma.done [#allocation9], 2560
    $region33: #{tpu_custom_call.1} parent=1 // pred_fallthru
      _
    %p50 = scmp.eq.s32.totalorder 0, 0
    // Predicated region
    $region34: #{tpu_custom_call.1} parent=1 // pred_check
      %p51 = pneg %p50
    $region35: #{tpu_custom_call.1} parent=1 // pred_check_branch
      %53 = sbr.rel (%p51) target = $region37
    $region36: #{tpu_custom_call.1} parent=1 // pred_region
      %v54 = vld [vmem:[%s2] sm:$0xff]
      %vm55 = vcmask 80896
      %56 = vst.msk [vmem:[#allocation3] sm:$0xff] %vm55, %v54
      %v57 = vld [vmem:[#allocation5] sm:$0xff]
      %58 = vst.msk [vmem:[#allocation4] sm:$0xff] %vm55, %v57
    $region37: #{tpu_custom_call.1} parent=1 // pred_fallthru
      _
    %v59 = vld [vmem:[%s0] sm:$0xff]
    %v60 = vld [vmem:[%s1] sm:$0xff]
    %v61 = vld [vmem:[#allocation8] sm:$0xf]
    %v62 = vld [vmem:[#allocation8 + $0x4] sm:$0xff]
    %vm63 = vcmask 64512
    %v65 = vsel %vm63, %v60, 0
    %67 = vmatprep.subr.mxu0 0.0
    %68 = vmatpush1.msra.mxu0 %v62
    %69 = vmatprep.subr.mxu0 0.0
    %70 = vmatpush1.msra.mxu0 0.0
    %71 = vmatprep.subr.mxu0 0.0
    %72 = vmatpush1.msra.mxu0 0.0
    %73 = vmatprep.subr.mxu0 0.0
    %74 = vmatpush1.msra.mxu0 0.0
    %75 = vmatprep.subr.mxu0 0.0
    %76 = vmatpush1.msra.mxu0 0.0
    %77 = vmatprep.subr.mxu0 0.0
    %78 = vmatpush1.msra.mxu0 0.0
    %79 = vmatprep.subr.mxu0 0.0
    %80 = vmatpush1.msra.mxu0 0.0
    %81 = vmatprep.subr.mxu0 0.0
    %82 = vmatpush1.msra.mxu0 0.0
    %83 = vmatprep.subr.mxu0 0.0
    %84 = vmatpush1.msra.mxu0 0.0
    %85 = vmatprep.subr.mxu0 0.0
    %86 = vmatpush1.msra.mxu0 0.0
    %87 = vmatprep.subr.mxu0 0.0
    %88 = vmatpush1.msra.mxu0 0.0
    %89 = vmatprep.subr.mxu0 0.0
    %90 = vmatpush1.msra.mxu0 0.0
    %91 = vmatprep.subr.mxu0 0.0
    %92 = vmatpush1.msra.mxu0 0.0
    %93 = vmatprep.subr.mxu0 0.0
    %94 = vmatpush1.msra.mxu0 0.0
    %95 = vmatprep.subr.mxu0 0.0
    %96 = vmatpush1.msra.mxu0 0.0
    %97 = vmatprep.subr.mxu0 0.0
    %98 = vmatpush1.msra.mxu0 0.0
    %99 = vmatprep.subr.mxu0 0.0
    %100 = vmatpush1.msra.mxu0 0.0
    %101 = vmatprep.subr.mxu0 0.0
    %102 = vmatpush1.msra.mxu0 0.0
    %103 = vmatprep.subr.mxu0 0.0
    %104 = vmatpush1.msra.mxu0 0.0
    %105 = vmatprep.subr.mxu0 0.0
    %106 = vmatpush1.msra.mxu0 0.0
    %107 = vmatprep.subr.mxu0 0.0
    %108 = vmatpush1.msra.mxu0 0.0
    %109 = vmatprep.subr.mxu0 0.0
    %110 = vmatpush1.msra.mxu0 0.0
    %111 = vmatprep.subr.mxu0 0.0
    %112 = vmatpush1.msra.mxu0 0.0
    %113 = vmatprep.subr.mxu0 0.0
    %114 = vmatpush1.msra.mxu0 0.0
    %115 = vmatprep.subr.mxu0 0.0
    %116 = vmatpush1.msra.mxu0 0.0
    %117 = vmatprep.subr.mxu0 0.0
    %118 = vmatpush1.msra.mxu0 0.0
    %119 = vmatprep.subr.mxu0 0.0
    %120 = vmatpush1.msra.mxu0 0.0
    %121 = vmatprep.subr.mxu0 0.0
    %122 = vmatpush1.msra.mxu0 0.0
    %123 = vmatprep.subr.mxu0 0.0
    %124 = vmatpush1.msra.mxu0 0.0
    %125 = vmatprep.subr.mxu0 0.0
    %126 = vmatpush1.msra.mxu0 0.0
    %127 = vmatprep.subr.mxu0 0.0
    %128 = vmatpush1.msra.mxu0 0.0
    %129 = vmatprep.subr.mxu0 0.0
    %130 = vmatpush1.msra.mxu0 0.0
    %131 = vmatprep.mubr.f32.mxu0 0.0
    %132 = vmatmul.mubr.f32.gmra.mrb[0].mxu0 %v65
    %v133 = vpop.f32.mrb[0].mxu0
    %v134 = vadd.f32 0.0, %v133
    %v135 = vpop.f32.mrb[0].mxu0
    %136 = vdwg.mxu0
    %vm137 = vcmask 31744
    %v139 = vsel %vm137, %v59, 0
    %vm141 = vcmask 1043456
    %v143 = vsel %vm141, %v61, 0
    %145 = vmatprep.subr.mxu0 0.0
    %146 = vmatpush1.msra.mxu0 %v143
    %147 = vmatprep.subr.mxu0 0.0
    %148 = vmatpush1.msra.mxu0 0.0
    %149 = vmatprep.subr.mxu0 0.0
    %150 = vmatpush1.msra.mxu0 0.0
    %151 = vmatprep.subr.mxu0 0.0
    %152 = vmatpush1.msra.mxu0 0.0
    %153 = vmatprep.subr.mxu0 0.0
    %154 = vmatpush1.msra.mxu0 0.0
    %155 = vmatprep.subr.mxu0 0.0
    %156 = vmatpush1.msra.mxu0 0.0
    %157 = vmatprep.subr.mxu0 0.0
    %158 = vmatpush1.msra.mxu0 0.0
    %159 = vmatprep.subr.mxu0 0.0
    %160 = vmatpush1.msra.mxu0 0.0
    %161 = vmatprep.subr.mxu0 0.0
    %162 = vmatpush1.msra.mxu0 0.0
    %163 = vmatprep.subr.mxu0 0.0
    %164 = vmatpush1.msra.mxu0 0.0
    %165 = vmatprep.subr.mxu0 0.0
    %166 = vmatpush1.msra.mxu0 0.0
    %167 = vmatprep.subr.mxu0 0.0
    %168 = vmatpush1.msra.mxu0 0.0
    %169 = vmatprep.subr.mxu0 0.0
    %170 = vmatpush1.msra.mxu0 0.0
    %171 = vmatprep.subr.mxu0 0.0
    %172 = vmatpush1.msra.mxu0 0.0
    %173 = vmatprep.subr.mxu0 0.0
    %174 = vmatpush1.msra.mxu0 0.0
    %175 = vmatprep.subr.mxu0 0.0
    %176 = vmatpush1.msra.mxu0 0.0
    %177 = vmatprep.subr.mxu0 0.0
    %178 = vmatpush1.msra.mxu0 0.0
    %179 = vmatprep.subr.mxu0 0.0
    %180 = vmatpush1.msra.mxu0 0.0
    %181 = vmatprep.subr.mxu0 0.0
    %182 = vmatpush1.msra.mxu0 0.0
    %183 = vmatprep.subr.mxu0 0.0
    %184 = vmatpush1.msra.mxu0 0.0
    %185 = vmatprep.subr.mxu0 0.0
    %186 = vmatpush1.msra.mxu0 0.0
    %187 = vmatprep.subr.mxu0 0.0
    %188 = vmatpush1.msra.mxu0 0.0
    %189 = vmatprep.subr.mxu0 0.0
    %190 = vmatpush1.msra.mxu0 0.0
    %191 = vmatprep.subr.mxu0 0.0
    %192 = vmatpush1.msra.mxu0 0.0
    %193 = vmatprep.subr.mxu0 0.0
    %194 = vmatpush1.msra.mxu0 0.0
    %195 = vmatprep.subr.mxu0 0.0
    %196 = vmatpush1.msra.mxu0 0.0
    %197 = vmatprep.subr.mxu0 0.0
    %198 = vmatpush1.msra.mxu0 0.0
    %199 = vmatprep.subr.mxu0 0.0
    %200 = vmatpush1.msra.mxu0 0.0
    %201 = vmatprep.subr.mxu0 0.0
    %202 = vmatpush1.msra.mxu0 0.0
    %203 = vmatprep.subr.mxu0 0.0
    %204 = vmatpush1.msra.mxu0 0.0
    %205 = vmatprep.subr.mxu0 0.0
    %206 = vmatpush1.msra.mxu0 0.0
    %207 = vmatprep.subr.mxu0 0.0
    %208 = vmatpush1.msra.mxu0 0.0
    %209 = vmatprep.mubr.f32.mxu0 0.0
    %210 = vmatmul.mubr.f32.gmra.mrb[0].mxu0 %v139
    %v211 = vpop.f32.mrb[0].mxu0
    %v212 = vadd.f32 %v134, %v211
    %v213 = vpop.f32.mrb[0].mxu0
    %214 = vdwg.mxu0
    %v215 = vld [vmem:[%s5] sm:$0x1]
    %v216 = vlaneseq
    %v217 = vshrl.u32 %v216, 7
    %v218 = vsub.s32 0, %v217
    %v219 = vrot.slane %v215, %v218
    %v220 = vadd.f32 %v212, %v219
    %v221 = vmax.f32 %v220, 0.0
    %v222 = vld [vmem:[#allocation8 + $0x10] sm:$0xff]
    %v223 = vld [vmem:[#allocation8 + $0x18] sm:$0xff]
    %v224 = vld [vmem:[#allocation8 + $0x20] sm:$0xff]
    %v225 = vld [vmem:[#allocation8 + $0x28] sm:$0xff]
    %v226 = vld [vmem:[%s5 + $0x1] sm:$0x1]
    %v227 = vlaneseq
    %v228 = vshrl.u32 %v227, 7
    %v229 = vsub.s32 0, %v228
    %v230 = vrot.slane %v226, %v229
    %vm231 = vcmask 261120
    %v233 = vsel %vm231, %v221, 0
    %235 = vmatprep.subr.mxu0 0.0
    %236 = vmatpush1.msra.mxu0 %v222
    %237 = vmatprep.subr.mxu0 0.0
    %238 = vmatpush1.msra.mxu0 %v223
    %239 = vmatprep.subr.mxu0 0.0
    %240 = vmatpush1.msra.mxu0 %v224
    %241 = vmatprep.subr.mxu0 0.0
    %242 = vmatpush1.msra.mxu0 %v225
    %243 = vmatprep.subr.mxu0 0.0
    %244 = vmatpush1.msra.mxu0 0.0
    %245 = vmatprep.subr.mxu0 0.0
    %246 = vmatpush1.msra.mxu0 0.0
    %247 = vmatprep.subr.mxu0 0.0
    %248 = vmatpush1.msra.mxu0 0.0
    %249 = vmatprep.subr.mxu0 0.0
    %250 = vmatpush1.msra.mxu0 0.0
    %251 = vmatprep.subr.mxu0 0.0
    %252 = vmatpush1.msra.mxu0 0.0
    %253 = vmatprep.subr.mxu0 0.0
    %254 = vmatpush1.msra.mxu0 0.0
    %255 = vmatprep.subr.mxu0 0.0
    %256 = vmatpush1.msra.mxu0 0.0
    %257 = vmatprep.subr.mxu0 0.0
    %258 = vmatpush1.msra.mxu0 0.0
    %259 = vmatprep.subr.mxu0 0.0
    %260 = vmatpush1.msra.mxu0 0.0
    %261 = vmatprep.subr.mxu0 0.0
    %262 = vmatpush1.msra.mxu0 0.0
    %263 = vmatprep.subr.mxu0 0.0
    %264 = vmatpush1.msra.mxu0 0.0
    %265 = vmatprep.subr.mxu0 0.0
    %266 = vmatpush1.msra.mxu0 0.0
    %267 = vmatprep.subr.mxu0 0.0
    %268 = vmatpush1.msra.mxu0 0.0
    %269 = vmatprep.subr.mxu0 0.0
    %270 = vmatpush1.msra.mxu0 0.0
    %271 = vmatprep.subr.mxu0 0.0
    %272 = vmatpush1.msra.mxu0 0.0
    %273 = vmatprep.subr.mxu0 0.0
    %274 = vmatpush1.msra.mxu0 0.0
    %275 = vmatprep.subr.mxu0 0.0
    %276 = vmatpush1.msra.mxu0 0.0
    %277 = vmatprep.subr.mxu0 0.0
    %278 = vmatpush1.msra.mxu0 0.0
    %279 = vmatprep.subr.mxu0 0.0
    %280 = vmatpush1.msra.mxu0 0.0
    %281 = vmatprep.subr.mxu0 0.0
    %282 = vmatpush1.msra.mxu0 0.0
    %283 = vmatprep.subr.mxu0 0.0
    %284 = vmatpush1.msra.mxu0 0.0
    %285 = vmatprep.subr.mxu0 0.0
    %286 = vmatpush1.msra.mxu0 0.0
    %287 = vmatprep.subr.mxu0 0.0
    %288 = vmatpush1.msra.mxu0 0.0
    %289 = vmatprep.subr.mxu0 0.0
    %290 = vmatpush1.msra.mxu0 0.0
    %291 = vmatprep.subr.mxu0 0.0
    %292 = vmatpush1.msra.mxu0 0.0
    %293 = vmatprep.subr.mxu0 0.0
    %294 = vmatpush1.msra.mxu0 0.0
    %295 = vmatprep.subr.mxu0 0.0
    %296 = vmatpush1.msra.mxu0 0.0
    %297 = vmatprep.subr.mxu0 0.0
    %298 = vmatpush1.msra.mxu0 0.0
    %299 = vmatprep.mubr.f32.mxu0 0.0
    %300 = vmatmul.mubr.f32.gmra.mrb[0].mxu0 %v233
    %v301 = vpop.f32.mrb[0].mxu0
    %v302 = vadd.f32 %v230, %v301
    %v303 = vpop.f32.mrb[0].mxu0
    %304 = vdwg.mxu0
    %v305 = vmax.f32 %v302, 0.0
    %v306 = vadd.f32 %v305, %v221
    %v307 = vld [vmem:[#allocation8 + $0x30] sm:$0xff]
    %v308 = vld [vmem:[#allocation8 + $0x38] sm:$0xff]
    %v309 = vld [vmem:[#allocation8 + $0x40] sm:$0xff]
    %v310 = vld [vmem:[#allocation8 + $0x48] sm:$0xff]
    %v311 = vld [vmem:[%s5 + $0x2] sm:$0x1]
    %v312 = vlaneseq
    %v313 = vshrl.u32 %v312, 7
    %v314 = vsub.s32 0, %v313
    %v315 = vrot.slane %v311, %v314
    %v317 = vsel %vm231, %v306, 0
    %319 = vmatprep.subr.mxu0 0.0
    %320 = vmatpush1.msra.mxu0 %v307
    %321 = vmatprep.subr.mxu0 0.0
    %322 = vmatpush1.msra.mxu0 %v308
    %323 = vmatprep.subr.mxu0 0.0
    %324 = vmatpush1.msra.mxu0 %v309
    %325 = vmatprep.subr.mxu0 0.0
    %326 = vmatpush1.msra.mxu0 %v310
    %327 = vmatprep.subr.mxu0 0.0
    %328 = vmatpush1.msra.mxu0 0.0
    %329 = vmatprep.subr.mxu0 0.0
    %330 = vmatpush1.msra.mxu0 0.0
    %331 = vmatprep.subr.mxu0 0.0
    %332 = vmatpush1.msra.mxu0 0.0
    %333 = vmatprep.subr.mxu0 0.0
    %334 = vmatpush1.msra.mxu0 0.0
    %335 = vmatprep.subr.mxu0 0.0
    %336 = vmatpush1.msra.mxu0 0.0
    %337 = vmatprep.subr.mxu0 0.0
    %338 = vmatpush1.msra.mxu0 0.0
    %339 = vmatprep.subr.mxu0 0.0
    %340 = vmatpush1.msra.mxu0 0.0
    %341 = vmatprep.subr.mxu0 0.0
    %342 = vmatpush1.msra.mxu0 0.0
    %343 = vmatprep.subr.mxu0 0.0
    %344 = vmatpush1.msra.mxu0 0.0
    %345 = vmatprep.subr.mxu0 0.0
    %346 = vmatpush1.msra.mxu0 0.0
    %347 = vmatprep.subr.mxu0 0.0
    %348 = vmatpush1.msra.mxu0 0.0
    %349 = vmatprep.subr.mxu0 0.0
    %350 = vmatpush1.msra.mxu0 0.0
    %351 = vmatprep.subr.mxu0 0.0
    %352 = vmatpush1.msra.mxu0 0.0
    %353 = vmatprep.subr.mxu0 0.0
    %354 = vmatpush1.msra.mxu0 0.0
    %355 = vmatprep.subr.mxu0 0.0
    %356 = vmatpush1.msra.mxu0 0.0
    %357 = vmatprep.subr.mxu0 0.0
    %358 = vmatpush1.msra.mxu0 0.0
    %359 = vmatprep.subr.mxu0 0.0
    %360 = vmatpush1.msra.mxu0 0.0
    %361 = vmatprep.subr.mxu0 0.0
    %362 = vmatpush1.msra.mxu0 0.0
    %363 = vmatprep.subr.mxu0 0.0
    %364 = vmatpush1.msra.mxu0 0.0
    %365 = vmatprep.subr.mxu0 0.0
    %366 = vmatpush1.msra.mxu0 0.0
    %367 = vmatprep.subr.mxu0 0.0
    %368 = vmatpush1.msra.mxu0 0.0
    %369 = vmatprep.subr.mxu0 0.0
    %370 = vmatpush1.msra.mxu0 0.0
    %371 = vmatprep.subr.mxu0 0.0
    %372 = vmatpush1.msra.mxu0 0.0
    %373 = vmatprep.subr.mxu0 0.0
    %374 = vmatpush1.msra.mxu0 0.0
    %375 = vmatprep.subr.mxu0 0.0
    %376 = vmatpush1.msra.mxu0 0.0
    %377 = vmatprep.subr.mxu0 0.0
    %378 = vmatpush1.msra.mxu0 0.0
    %379 = vmatprep.subr.mxu0 0.0
    %380 = vmatpush1.msra.mxu0 0.0
    %381 = vmatprep.subr.mxu0 0.0
    %382 = vmatpush1.msra.mxu0 0.0
    %383 = vmatprep.mubr.f32.mxu0 0.0
    %384 = vmatmul.mubr.f32.gmra.mrb[0].mxu0 %v317
    %v385 = vpop.f32.mrb[0].mxu0
    %v386 = vadd.f32 %v315, %v385
    %v387 = vpop.f32.mrb[0].mxu0
    %388 = vdwg.mxu0
    %v389 = vmax.f32 %v386, 0.0
    %v390 = vld [vmem:[#allocation8 + $0x50] sm:$0xff]
    %v391 = vld [vmem:[#allocation8 + $0x58] sm:$0xff]
    %v392 = vld [vmem:[#allocation8 + $0x60] sm:$0xff]
    %v393 = vld [vmem:[#allocation8 + $0x68] sm:$0xff]
    %v394 = vld [vmem:[%s5 + $0x3] sm:$0x1]
    %v395 = vlaneseq
    %v396 = vshrl.u32 %v395, 7
    %v397 = vsub.s32 0, %v396
    %v398 = vrot.slane %v394, %v397
    %v400 = vsel %vm231, %v389, 0
    %402 = vmatprep.subr.mxu0 0.0
    %403 = vmatpush1.msra.mxu0 %v390
    %404 = vmatprep.subr.mxu0 0.0
    %405 = vmatpush1.msra.mxu0 %v391
    %406 = vmatprep.subr.mxu0 0.0
    %407 = vmatpush1.msra.mxu0 %v392
    %408 = vmatprep.subr.mxu0 0.0
    %409 = vmatpush1.msra.mxu0 %v393
    %410 = vmatprep.subr.mxu0 0.0
    %411 = vmatpush1.msra.mxu0 0.0
    %412 = vmatprep.subr.mxu0 0.0
    %413 = vmatpush1.msra.mxu0 0.0
    %414 = vmatprep.subr.mxu0 0.0
    %415 = vmatpush1.msra.mxu0 0.0
    %416 = vmatprep.subr.mxu0 0.0
    %417 = vmatpush1.msra.mxu0 0.0
    %418 = vmatprep.subr.mxu0 0.0
    %419 = vmatpush1.msra.mxu0 0.0
    %420 = vmatprep.subr.mxu0 0.0
    %421 = vmatpush1.msra.mxu0 0.0
    %422 = vmatprep.subr.mxu0 0.0
    %423 = vmatpush1.msra.mxu0 0.0
    %424 = vmatprep.subr.mxu0 0.0
    %425 = vmatpush1.msra.mxu0 0.0
    %426 = vmatprep.subr.mxu0 0.0
    %427 = vmatpush1.msra.mxu0 0.0
    %428 = vmatprep.subr.mxu0 0.0
    %429 = vmatpush1.msra.mxu0 0.0
    %430 = vmatprep.subr.mxu0 0.0
    %431 = vmatpush1.msra.mxu0 0.0
    %432 = vmatprep.subr.mxu0 0.0
    %433 = vmatpush1.msra.mxu0 0.0
    %434 = vmatprep.subr.mxu0 0.0
    %435 = vmatpush1.msra.mxu0 0.0
    %436 = vmatprep.subr.mxu0 0.0
    %437 = vmatpush1.msra.mxu0 0.0
    %438 = vmatprep.subr.mxu0 0.0
    %439 = vmatpush1.msra.mxu0 0.0
    %440 = vmatprep.subr.mxu0 0.0
    %441 = vmatpush1.msra.mxu0 0.0
    %442 = vmatprep.subr.mxu0 0.0
    %443 = vmatpush1.msra.mxu0 0.0
    %444 = vmatprep.subr.mxu0 0.0
    %445 = vmatpush1.msra.mxu0 0.0
    %446 = vmatprep.subr.mxu0 0.0
    %447 = vmatpush1.msra.mxu0 0.0
    %448 = vmatprep.subr.mxu0 0.0
    %449 = vmatpush1.msra.mxu0 0.0
    %450 = vmatprep.subr.mxu0 0.0
    %451 = vmatpush1.msra.mxu0 0.0
    %452 = vmatprep.subr.mxu0 0.0
    %453 = vmatpush1.msra.mxu0 0.0
    %454 = vmatprep.subr.mxu0 0.0
    %455 = vmatpush1.msra.mxu0 0.0
    %456 = vmatprep.subr.mxu0 0.0
    %457 = vmatpush1.msra.mxu0 0.0
    %458 = vmatprep.subr.mxu0 0.0
    %459 = vmatpush1.msra.mxu0 0.0
    %460 = vmatprep.subr.mxu0 0.0
    %461 = vmatpush1.msra.mxu0 0.0
    %462 = vmatprep.subr.mxu0 0.0
    %463 = vmatpush1.msra.mxu0 0.0
    %464 = vmatprep.subr.mxu0 0.0
    %465 = vmatpush1.msra.mxu0 0.0
    %466 = vmatprep.mubr.f32.mxu0 0.0
    %467 = vmatmul.mubr.f32.gmra.mrb[0].mxu0 %v400
    %v468 = vpop.f32.mrb[0].mxu0
    %v469 = vadd.f32 %v398, %v468
    %v470 = vpop.f32.mrb[0].mxu0
    %471 = vdwg.mxu0
    %472 = vst [vmem:[#allocation2] sm:$0xff] %v469
    %v473 = vld [vmem:[#allocation8 + $0x70] sm:$0xff]
    %v474 = vld [vmem:[#allocation8 + $0x78] sm:$0x3]
    %v475 = vld [vmem:[#allocation8 + $0x80] sm:$0xff]
    %v476 = vld [vmem:[#allocation8 + $0x88] sm:$0x3]
    %v477 = vld [vmem:[#allocation8 + $0x90] sm:$0xff]
    %v478 = vld [vmem:[#allocation8 + $0x98] sm:$0x3]
    %v479 = vld [vmem:[%s5 + $0x4] sm:$0x1]
    %v480 = vlaneseq
    %v481 = vshrl.u32 %v480, 7
    %v482 = vsub.s32 0, %v481
    %v483 = vrot.slane %v479, %v482
    %v484 = vld [vmem:[%s5 + $0x5] sm:$0x1]
    %v485 = vlaneseq
    %v486 = vshrl.u32 %v485, 7
    %v487 = vsub.s32 0, %v486
    %v488 = vrot.slane %v484, %v487
    %v489 = vld [vmem:[#allocation3] sm:$0xff]
    %v490 = vld [vmem:[#allocation4] sm:$0xff]
    %v491 = vld [vmem:[#allocation2] sm:$0xff]
    %vm492 = vcmask 80896
    %v494 = vsel %vm492, %v490, 0
    %vm496 = vcmask 1041408
    %v498 = vsel %vm496, %v474, 0
    %500 = vmatprep.subr.mxu0 0.0
    %501 = vmatpush1.msra.mxu0 %v473
    %502 = vmatprep.subr.mxu0 0.0
    %503 = vmatpush1.msra.mxu0 %v498
    %504 = vmatprep.subr.mxu0 0.0
    %505 = vmatpush1.msra.mxu0 0.0
    %506 = vmatprep.subr.mxu0 0.0
    %507 = vmatpush1.msra.mxu0 0.0
    %508 = vmatprep.subr.mxu0 0.0
    %509 = vmatpush1.msra.mxu0 0.0
    %510 = vmatprep.subr.mxu0 0.0
    %511 = vmatpush1.msra.mxu0 0.0
    %512 = vmatprep.subr.mxu0 0.0
    %513 = vmatpush1.msra.mxu0 0.0
    %514 = vmatprep.subr.mxu0 0.0
    %515 = vmatpush1.msra.mxu0 0.0
    %516 = vmatprep.subr.mxu0 0.0
    %517 = vmatpush1.msra.mxu0 0.0
    %518 = vmatprep.subr.mxu0 0.0
    %519 = vmatpush1.msra.mxu0 0.0
    %520 = vmatprep.subr.mxu0 0.0
    %521 = vmatpush1.msra.mxu0 0.0
    %522 = vmatprep.subr.mxu0 0.0
    %523 = vmatpush1.msra.mxu0 0.0
    %524 = vmatprep.subr.mxu0 0.0
    %525 = vmatpush1.msra.mxu0 0.0
    %526 = vmatprep.subr.mxu0 0.0
    %527 = vmatpush1.msra.mxu0 0.0
    %528 = vmatprep.subr.mxu0 0.0
    %529 = vmatpush1.msra.mxu0 0.0
    %530 = vmatprep.subr.mxu0 0.0
    %531 = vmatpush1.msra.mxu0 0.0
    %532 = vmatprep.subr.mxu0 0.0
    %533 = vmatpush1.msra.mxu0 0.0
    %534 = vmatprep.subr.mxu0 0.0
    %535 = vmatpush1.msra.mxu0 0.0
    %536 = vmatprep.subr.mxu0 0.0
    %537 = vmatpush1.msra.mxu0 0.0
    %538 = vmatprep.subr.mxu0 0.0
    %539 = vmatpush1.msra.mxu0 0.0
    %540 = vmatprep.subr.mxu0 0.0
    %541 = vmatpush1.msra.mxu0 0.0
    %542 = vmatprep.subr.mxu0 0.0
    %543 = vmatpush1.msra.mxu0 0.0
    %544 = vmatprep.subr.mxu0 0.0
    %545 = vmatpush1.msra.mxu0 0.0
    %546 = vmatprep.subr.mxu0 0.0
    %547 = vmatpush1.msra.mxu0 0.0
    %548 = vmatprep.subr.mxu0 0.0
    %549 = vmatpush1.msra.mxu0 0.0
    %550 = vmatprep.subr.mxu0 0.0
    %551 = vmatpush1.msra.mxu0 0.0
    %552 = vmatprep.subr.mxu0 0.0
    %553 = vmatpush1.msra.mxu0 0.0
    %554 = vmatprep.subr.mxu0 0.0
    %555 = vmatpush1.msra.mxu0 0.0
    %556 = vmatprep.subr.mxu0 0.0
    %557 = vmatpush1.msra.mxu0 0.0
    %558 = vmatprep.subr.mxu0 0.0
    %559 = vmatpush1.msra.mxu0 0.0
    %560 = vmatprep.subr.mxu0 0.0
    %561 = vmatpush1.msra.mxu0 0.0
    %562 = vmatprep.subr.mxu0 0.0
    %563 = vmatpush1.msra.mxu0 0.0
    %564 = vmatprep.mubr.f32.mxu0 0.0
    %565 = vmatmul.mubr.f32.gmra.mrb[0].mxu0 %v494
    %v566 = vpop.f32.mrb[0].mxu0
    %v567 = vadd.f32 0.0, %v566
    %v568 = vpop.f32.mrb[0].mxu0
    %569 = vdwg.mxu0
    %v570 = vadd.f32 %v491, %v567
    %v571 = vxor.u32 %v570, 2147483648
    %v572 = vmul.f32 %v571, 1.442695
    %v573 = vpow.pop %v572
    %v574 = vadd.f32 %v573, 1.0
    %v575 = vrcp.pop %v574
    %v576 = vmul.f32 1.0, %v575
    %v577 = vtanh.pop %v570
    %v578 = vmul.f32 %v576, %v489
    %580 = vrot.lane.b32.xlu0 %v577, 64
    %v581 = vpop.permute.xlu0 %580
    %v583 = vmul.f32 %v576, %v581
    %585 = vrot.lane.b32.xlu0 %v583, 96
    %v586 = vpop.permute.xlu0 %585
    %v588 = vadd.f32 %v578, %v586
    %v589 = vtanh.pop %v588
    %591 = vrot.lane.b32.xlu0 %v589, 64
    %v592 = vpop.permute.xlu0 %591
    %v594 = vmul.f32 %v576, %v592
    %596 = vrot.lane.b32.xlu0 %v594, 64
    %v597 = vpop.permute.xlu0 %596
    %v598 = vsel %vm492, %v597, 0
    %v601 = vsel %vm496, %v476, 0
    %603 = vmatprep.subr.mxu0 0.0
    %604 = vmatpush1.msra.mxu0 %v475
    %605 = vmatprep.subr.mxu0 0.0
    %606 = vmatpush1.msra.mxu0 %v601
    %607 = vmatprep.subr.mxu0 0.0
    %608 = vmatpush1.msra.mxu0 0.0
    %609 = vmatprep.subr.mxu0 0.0
    %610 = vmatpush1.msra.mxu0 0.0
    %611 = vmatprep.subr.mxu0 0.0
    %612 = vmatpush1.msra.mxu0 0.0
    %613 = vmatprep.subr.mxu0 0.0
    %614 = vmatpush1.msra.mxu0 0.0
    %615 = vmatprep.subr.mxu0 0.0
    %616 = vmatpush1.msra.mxu0 0.0
    %617 = vmatprep.subr.mxu0 0.0
    %618 = vmatpush1.msra.mxu0 0.0
    %619 = vmatprep.subr.mxu0 0.0
    %620 = vmatpush1.msra.mxu0 0.0
    %621 = vmatprep.subr.mxu0 0.0
    %622 = vmatpush1.msra.mxu0 0.0
    %623 = vmatprep.subr.mxu0 0.0
    %624 = vmatpush1.msra.mxu0 0.0
    %625 = vmatprep.subr.mxu0 0.0
    %626 = vmatpush1.msra.mxu0 0.0
    %627 = vmatprep.subr.mxu0 0.0
    %628 = vmatpush1.msra.mxu0 0.0
    %629 = vmatprep.subr.mxu0 0.0
    %630 = vmatpush1.msra.mxu0 0.0
    %631 = vmatprep.subr.mxu0 0.0
    %632 = vmatpush1.msra.mxu0 0.0
    %633 = vmatprep.subr.mxu0 0.0
    %634 = vmatpush1.msra.mxu0 0.0
    %635 = vmatprep.subr.mxu0 0.0
    %636 = vmatpush1.msra.mxu0 0.0
    %637 = vmatprep.subr.mxu0 0.0
    %638 = vmatpush1.msra.mxu0 0.0
    %639 = vmatprep.subr.mxu0 0.0
    %640 = vmatpush1.msra.mxu0 0.0
    %641 = vmatprep.subr.mxu0 0.0
    %642 = vmatpush1.msra.mxu0 0.0
    %643 = vmatprep.subr.mxu0 0.0
    %644 = vmatpush1.msra.mxu0 0.0
    %645 = vmatprep.subr.mxu0 0.0
    %646 = vmatpush1.msra.mxu0 0.0
    %647 = vmatprep.subr.mxu0 0.0
    %648 = vmatpush1.msra.mxu0 0.0
    %649 = vmatprep.subr.mxu0 0.0
    %650 = vmatpush1.msra.mxu0 0.0
    %651 = vmatprep.subr.mxu0 0.0
    %652 = vmatpush1.msra.mxu0 0.0
    %653 = vmatprep.subr.mxu0 0.0
    %654 = vmatpush1.msra.mxu0 0.0
    %655 = vmatprep.subr.mxu0 0.0
    %656 = vmatpush1.msra.mxu0 0.0
    %657 = vmatprep.subr.mxu0 0.0
    %658 = vmatpush1.msra.mxu0 0.0
    %659 = vmatprep.subr.mxu0 0.0
    %660 = vmatpush1.msra.mxu0 0.0
    %661 = vmatprep.subr.mxu0 0.0
    %662 = vmatpush1.msra.mxu0 0.0
    %663 = vmatprep.subr.mxu0 0.0
    %664 = vmatpush1.msra.mxu0 0.0
    %665 = vmatprep.subr.mxu0 0.0
    %666 = vmatpush1.msra.mxu0 0.0
    %667 = vmatprep.mubr.f32.mxu0 0.0
    %668 = vmatmul.mubr.f32.gmra.mrb[0].mxu0 %v598
    %v669 = vpop.f32.mrb[0].mxu0
    %v670 = vadd.f32 %v483, %v669
    %v671 = vpop.f32.mrb[0].mxu0
    %672 = vdwg.mxu0
    %v673 = vmax.f32 %v670, 0.0
    %v675 = vsel %vm492, %v673, 0
    %v678 = vsel %vm496, %v478, 0
    %680 = vmatprep.subr.mxu0 0.0
    %681 = vmatpush1.msra.mxu0 %v477
    %682 = vmatprep.subr.mxu0 0.0
    %683 = vmatpush1.msra.mxu0 %v678
    %684 = vmatprep.subr.mxu0 0.0
    %685 = vmatpush1.msra.mxu0 0.0
    %686 = vmatprep.subr.mxu0 0.0
    %687 = vmatpush1.msra.mxu0 0.0
    %688 = vmatprep.subr.mxu0 0.0
    %689 = vmatpush1.msra.mxu0 0.0
    %690 = vmatprep.subr.mxu0 0.0
    %691 = vmatpush1.msra.mxu0 0.0
    %692 = vmatprep.subr.mxu0 0.0
    %693 = vmatpush1.msra.mxu0 0.0
    %694 = vmatprep.subr.mxu0 0.0
    %695 = vmatpush1.msra.mxu0 0.0
    %696 = vmatprep.subr.mxu0 0.0
    %697 = vmatpush1.msra.mxu0 0.0
    %698 = vmatprep.subr.mxu0 0.0
    %699 = vmatpush1.msra.mxu0 0.0
    %700 = vmatprep.subr.mxu0 0.0
    %701 = vmatpush1.msra.mxu0 0.0
    %702 = vmatprep.subr.mxu0 0.0
    %703 = vmatpush1.msra.mxu0 0.0
    %704 = vmatprep.subr.mxu0 0.0
    %705 = vmatpush1.msra.mxu0 0.0
    %706 = vmatprep.subr.mxu0 0.0
    %707 = vmatpush1.msra.mxu0 0.0
    %708 = vmatprep.subr.mxu0 0.0
    %709 = vmatpush1.msra.mxu0 0.0
    %710 = vmatprep.subr.mxu0 0.0
    %711 = vmatpush1.msra.mxu0 0.0
    %712 = vmatprep.subr.mxu0 0.0
    %713 = vmatpush1.msra.mxu0 0.0
    %714 = vmatprep.subr.mxu0 0.0
    %715 = vmatpush1.msra.mxu0 0.0
    %716 = vmatprep.subr.mxu0 0.0
    %717 = vmatpush1.msra.mxu0 0.0
    %718 = vmatprep.subr.mxu0 0.0
    %719 = vmatpush1.msra.mxu0 0.0
    %720 = vmatprep.subr.mxu0 0.0
    %721 = vmatpush1.msra.mxu0 0.0
    %722 = vmatprep.subr.mxu0 0.0
    %723 = vmatpush1.msra.mxu0 0.0
    %724 = vmatprep.subr.mxu0 0.0
    %725 = vmatpush1.msra.mxu0 0.0
    %726 = vmatprep.subr.mxu0 0.0
    %727 = vmatpush1.msra.mxu0 0.0
    %728 = vmatprep.subr.mxu0 0.0
    %729 = vmatpush1.msra.mxu0 0.0
    %730 = vmatprep.subr.mxu0 0.0
    %731 = vmatpush1.msra.mxu0 0.0
    %732 = vmatprep.subr.mxu0 0.0
    %733 = vmatpush1.msra.mxu0 0.0
    %734 = vmatprep.subr.mxu0 0.0
    %735 = vmatpush1.msra.mxu0 0.0
    %736 = vmatprep.subr.mxu0 0.0
    %737 = vmatpush1.msra.mxu0 0.0
    %738 = vmatprep.subr.mxu0 0.0
    %739 = vmatpush1.msra.mxu0 0.0
    %740 = vmatprep.subr.mxu0 0.0
    %741 = vmatpush1.msra.mxu0 0.0
    %742 = vmatprep.subr.mxu0 0.0
    %743 = vmatpush1.msra.mxu0 0.0
    %744 = vmatprep.mubr.f32.mxu0 0.0
    %745 = vmatmul.mubr.f32.gmra.mrb[0].mxu0 %v675
    %v746 = vpop.f32.mrb[0].mxu0
    %v747 = vadd.f32 %v488, %v746
    %v748 = vpop.f32.mrb[0].mxu0
    %749 = vdwg.mxu0
    %v750 = vsel %vm137, %v747, -inf
    %751 = vmax.xlane.f32.xlu0 %v750
    %v752 = vpop.xlane.xlu0 %751
    %v753 = vsub.f32 %v747, %v752
    %v754 = vmul.f32 %v753, 1.442695
    %v755 = vpow.pop %v754
    %v756 = vsel %vm137, %v755, 0.0
    %757 = vadd.xlane.f32.xlu0 %v756
    %v758 = vpop.xlane.xlu0 %757
    %v759 = vrcp.pop %v758
    %v760 = vmul.f32 %v755, %v759
    %762 = vrot.lane.b32.xlu0 %v588, 4
    %v763 = vpop.permute.xlu0 %762
    %765 = vrot.lane.b32.xlu0 %v594, 78
    %v766 = vpop.permute.xlu0 %765
    %v768 = vsel %vm137, %v760, %v763
    %vm769 = vcmask 113664
    %v770 = vsel %vm769, %v768, %v766
    %vm771 = vcmask 195584
    %v772 = vsel %vm771, %v770, 0.0
    %773 = vst [vmem:[#allocation10] sm:$0xff] %v772
    %774 = vst.msk [vmem:[#allocation3] sm:$0xff] %vm492, %v588
    %776 = vst.msk [vmem:[#allocation4] sm:$0xff] %vm492, %v597
    // Predicated region
    $region38: #{tpu_custom_call.1} parent=1 // pred_check
      _
    $region39: #{tpu_custom_call.1} parent=1 // pred_check_branch
      %778 = sbr.rel (0) target = $region41
    $region40: #{tpu_custom_call.1} parent=1 // pred_region
      %s780 = ssub.s32 128, 128
      %781 = vsyncadd [#allocation7], %s780
      %s783 = sshll.u32 [#allocation10], 4
      %s784 = int_to_ptr.vmem [resolvable:$true] %s783
      %786 = dma.vmem_to_hbm [thread:$0]  %s784, 128, %s6, [#allocation7]
    $region41: #{tpu_custom_call.1} parent=1 // pred_fallthru
      _
    // Predicated region
    $region42: #{tpu_custom_call.1} parent=1 // pred_check
      _
    $region43: #{tpu_custom_call.1} parent=1 // pred_check_branch
      %788 = sbr.rel (0) target = $region45
    $region44: #{tpu_custom_call.1} parent=1 // pred_region
      %789 = dma.done [#allocation7], 128
    $region45: #{tpu_custom_call.1} parent=1 // pred_fallthru
      _
    %790 = vsyncpa [#allocation6], 1
    %791 = vsyncpa [#allocation9], 1
    %792 = vsyncpa [#allocation7], 1

</llo_original>
